<compile_context>
chip_gen: v6e
topology: v6e:2x2x1
jax: 0.10.0
libtpu: 0.0.40
codegen_flags: <defaults>
</compile_context>

<pallas_src>
import functools

import jax
import jax.numpy as jnp
from jax.experimental import pallas as pl
from jax.experimental.pallas import tpu as pltpu

IN_FEATURES = 198
HIDDEN = 80
HIDDEN_PAD = 128          # 80 -> 128: lane-dense hidden activations
OUT_FEATURES = 2
OUT_PAD = 128             # 2 -> 128: lane-dense output store
MAX_TILE_M = 1024         # batch rows per grid step (fits VMEM with big margin)


def _round_up(n: int, m: int) -> int:
    return ((n + m - 1) // m) * m


def _sigmoid(x):
    # 0.5*(tanh(0.5*x)+1) == logistic sigmoid; tanh runs on the EUP slot,
    # keeping the VALU free (vs. an f32 divide for 1/(1+exp(-x))).
    return 0.5 * (jnp.tanh(0.5 * x) + 1.0)


def _mlp_kernel(x_ref, w1_ref, b1_ref, w2_ref, b2_ref, o_ref):
    # Layer 1: Linear(198 -> 128pad) + sigmoid.  bf16 MXU inputs, f32 accumulate.
    h = jnp.dot(x_ref[...], w1_ref[...], preferred_element_type=jnp.float32)
    h = _sigmoid(h + b1_ref[...])                      # [tile_m, 128] f32, lane-dense

    # Layer 2: Linear(128pad -> 128pad) + sigmoid.  Padded w2 rows/cols are exactly
    # zero, so columns 0..1 equal the true 2 logits; the 128-wide store is lane-dense.
    y = jnp.dot(h, w2_ref[...], preferred_element_type=jnp.float32)
    o_ref[...] = _sigmoid(y + b2_ref[...])


@functools.partial(jax.jit, static_argnames=("tile_m",))
def backgammon_forward(x, w1_pad, b1_pad, w2_pad, b2_pad, *, tile_m=MAX_TILE_M):
    """sigmoid(sigmoid(x @ W1 + b1) @ W2 + b2), tiled over the batch dimension.

    x        : [B, 198] f32 (cast to bf16 internally)
    w1_pad   : [198, 128] (cols 80..127 zero)
    b1_pad   : [1, 128]   (cols 80..127 zero)
    w2_pad   : [128, 128] (rows 80..127 and cols 2..127 zero)
    b2_pad   : [1, 128]   (cols 2..127 zero)
    returns  : [B, 2] f32
    """
    B = x.shape[0]
    assert x.shape[1] == IN_FEATURES

    # Batch tile: multiple of 16 (bf16 sublane packing), capped at tile_m.
    tm = min(tile_m, _round_up(B, 16))
    b_pad = _round_up(B, tm)
    if b_pad != B:
        # TODO(synk): for huge non-multiple batches, pre-pad at data-loading time
        # to avoid this extra HBM copy of x.
        x = jnp.pad(x, ((0, b_pad - B), (0, 0)))

    x_bf16 = x.astype(jnp.bfloat16)
    w1_bf16 = w1_pad.astype(jnp.bfloat16)

    grid = (pl.cdiv(b_pad, tm),)

    out = pl.pallas_call(
        _mlp_kernel,
        out_shape=jax.ShapeDtypeStruct((b_pad, OUT_PAD), jnp.float32),
        grid=grid,
        in_specs=[
            pl.BlockSpec((tm, IN_FEATURES), lambda i: (i, 0)),          # x tile (pipelined)
            pl.BlockSpec((IN_FEATURES, HIDDEN_PAD), lambda i: (0, 0)),  # w1 resident
            pl.BlockSpec((1, HIDDEN_PAD), lambda i: (0, 0)),            # b1 resident
            pl.BlockSpec((HIDDEN_PAD, OUT_PAD), lambda i: (0, 0)),      # w2 resident
            pl.BlockSpec((1, OUT_PAD), lambda i: (0, 0)),               # b2 resident
        ],
        out_specs=pl.BlockSpec((tm, OUT_PAD), lambda i: (i, 0)),
        compiler_params=pltpu.CompilerParams(
            dimension_semantics=("parallel",),   # megacore sharding on v7x; no-op v5e/v6e
        ),
    )(x_bf16, w1_bf16, b1_pad, w2_pad, b2_pad)

    return out[:B, :OUT_FEATURES]


def init_params(key):
    """Mirror of the PyTorch init, returned in the padded TPU-friendly layout.

    PyTorch: nn.init.normal_(weight, 0, 1) for both Linear weights; biases use the
    Linear default U(-1/sqrt(fan_in), +1/sqrt(fan_in)).  Weights are stored
    transposed ([in, out]) so the kernel computes x @ W; hidden / output dims are
    zero-padded to 128 once here.
    """
    k1, k2, k3, k4 = jax.random.split(key, 4)
    w1 = jax.random.normal(k1, (IN_FEATURES, HIDDEN), dtype=jnp.float32)   # N(0, 1)
    w2 = jax.random.normal(k2, (HIDDEN, OUT_FEATURES), dtype=jnp.float32)  # N(0, 1)
    bound1 = 1.0 / jnp.sqrt(float(IN_FEATURES))
    bound2 = 1.0 / jnp.sqrt(float(HIDDEN))
    b1 = jax.random.uniform(k3, (1, HIDDEN), jnp.float32, -bound1, bound1)
    b2 = jax.random.uniform(k4, (1, OUT_FEATURES), jnp.float32, -bound2, bound2)

    # Padded w2 rows/cols MUST be exactly zero so the padded hidden/output
    # columns cannot perturb the real logits.
    w1_pad = jnp.zeros((IN_FEATURES, HIDDEN_PAD), jnp.float32).at[:, :HIDDEN].set(w1)
    b1_pad = jnp.zeros((1, HIDDEN_PAD), jnp.float32).at[:, :HIDDEN].set(b1)
    w2_pad = jnp.zeros((HIDDEN_PAD, OUT_PAD), jnp.float32).at[:HIDDEN, :OUT_FEATURES].set(w2)
    b2_pad = jnp.zeros((1, OUT_PAD), jnp.float32).at[:, :OUT_FEATURES].set(b2)
    return w1_pad, b1_pad, w2_pad, b2_pad


def reference_forward(x, w1_pad, b1_pad, w2_pad, b2_pad):
    """Plain-JAX reference replicating the kernel numerics (bf16 MXU inputs, f32 acc)."""
    xq = x.astype(jnp.bfloat16).astype(jnp.float32)
    w1q = w1_pad.astype(jnp.bfloat16).astype(jnp.float32)
    h = _sigmoid(jnp.dot(xq, w1q, precision=jax.lax.Precision.HIGHEST) + b1_pad)
    y = _sigmoid(jnp.dot(h, w2_pad, precision=jax.lax.Precision.HIGHEST) + b2_pad)
    return y[:, :OUT_FEATURES]


if __name__ == "__main__":
    key = jax.random.PRNGKey(0)
    k_x, k_p = jax.random.split(key)

    # Small batch of encoded backgammon states: [B, 198].
    # (Real workloads should batch thousands of board positions per call —
    #  kernel launch overhead dominates tiny batches on every TPU generation.)
    B = 8
    x = jax.random.uniform(k_x, (B, IN_FEATURES), dtype=jnp.float32)

    params = init_params(k_p)

    out = backgammon_forward(x, *params)
    out = jax.block_until_ready(out)

    ref = reference_forward(x, *params)
    assert out.shape == (B, OUT_FEATURES)
    max_err = jnp.max(jnp.abs(out - ref))
    assert jnp.allclose(out, ref, atol=1e-4, rtol=1e-4), f"mismatch vs reference: {max_err}"

    print("KERNEL_OK")
</pallas_src>

<mosaic_0001>
module attributes {stable_mosaic.version = 11 : i64} {
  func.func @_mlp_kernel(%arg0: i32, %arg1: memref<16x198xbf16, #tpu.memory_space<vmem>>, %arg2: memref<198x128xbf16, #tpu.memory_space<vmem>>, %arg3: memref<1x128xf32, #tpu.memory_space<vmem>>, %arg4: memref<128x128xf32, #tpu.memory_space<vmem>>, %arg5: memref<1x128xf32, #tpu.memory_space<vmem>>, %arg6: memref<16x128xf32, #tpu.memory_space<vmem>>) attributes {dimension_semantics = [#tpu.dimension_semantics<parallel>], iteration_bounds = array<i64: 1>, scalar_prefetch = 0 : i64, scratch_operands = 0 : i64, tpu.core_type = #tpu.core_type<tc>, window_params = [{transform_indices = @transform_0, window_bounds = array<i64: 16, 198>}, {pipeline_mode = #tpu.pipeline_mode<synchronous>, transform_indices = @transform_1, window_bounds = array<i64: 198, 128>}, {pipeline_mode = #tpu.pipeline_mode<synchronous>, transform_indices = @transform_2, window_bounds = array<i64: 1, 128>}, {pipeline_mode = #tpu.pipeline_mode<synchronous>, transform_indices = @transform_3, window_bounds = array<i64: 128, 128>}, {pipeline_mode = #tpu.pipeline_mode<synchronous>, transform_indices = @transform_4, window_bounds = array<i64: 1, 128>}, {transform_indices = @transform_5, window_bounds = array<i64: 16, 128>}]} {
    %c0 = arith.constant 0 : index
    %c0_0 = arith.constant 0 : index
    %0 = vector.load %arg1[%c0, %c0_0] : memref<16x198xbf16, #tpu.memory_space<vmem>>, vector<16x198xbf16>
    %c0_1 = arith.constant 0 : index
    %c0_2 = arith.constant 0 : index
    %1 = vector.load %arg2[%c0_1, %c0_2] : memref<198x128xbf16, #tpu.memory_space<vmem>>, vector<198x128xbf16>
    %cst = arith.constant dense<0.000000e+00> : vector<16x128xf32>
    %2 = tpu.matmul %0, %1, %cst {dimension_numbers = #tpu.dot_dimension_numbers<[1], [0], [0], [1], [0, 0, 1, 1], [], []>} : vector<16x198xbf16>, vector<198x128xbf16>, vector<16x128xf32> -> vector<16x128xf32>
    %c0_3 = arith.constant 0 : index
    %c0_4 = arith.constant 0 : index
    %3 = vector.load %arg3[%c0_3, %c0_4] : memref<1x128xf32, #tpu.memory_space<vmem>>, vector<1x128xf32>
    %4 = vector.broadcast %3 : vector<1x128xf32> to vector<16x128xf32>
    %5 = arith.addf %2, %4 : vector<16x128xf32>
    %cst_5 = arith.constant 5.000000e-01 : f32
    %6 = vector.broadcast %cst_5 : f32 to vector<16x128xf32>
    %7 = arith.mulf %6, %5 : vector<16x128xf32>
    %8 = math.tanh %7 : vector<16x128xf32>
    %cst_6 = arith.constant 1.000000e+00 : f32
    %9 = vector.broadcast %cst_6 : f32 to vector<16x128xf32>
    %10 = arith.addf %8, %9 : vector<16x128xf32>
    %cst_7 = arith.constant 5.000000e-01 : f32
    %11 = vector.broadcast %cst_7 : f32 to vector<16x128xf32>
    %12 = arith.mulf %11, %10 : vector<16x128xf32>
    %c0_8 = arith.constant 0 : index
    %c0_9 = arith.constant 0 : index
    %13 = vector.load %arg4[%c0_8, %c0_9] : memref<128x128xf32, #tpu.memory_space<vmem>>, vector<128x128xf32>
    %cst_10 = arith.constant dense<0.000000e+00> : vector<16x128xf32>
    %14 = tpu.matmul %12, %13, %cst_10 {dimension_numbers = #tpu.dot_dimension_numbers<[1], [0], [0], [1], [0, 0, 1, 1], [], []>} : vector<16x128xf32>, vector<128x128xf32>, vector<16x128xf32> -> vector<16x128xf32>
    %c0_11 = arith.constant 0 : index
    %c0_12 = arith.constant 0 : index
    %15 = vector.load %arg5[%c0_11, %c0_12] : memref<1x128xf32, #tpu.memory_space<vmem>>, vector<1x128xf32>
    %16 = vector.broadcast %15 : vector<1x128xf32> to vector<16x128xf32>
    %17 = arith.addf %14, %16 : vector<16x128xf32>
    %cst_13 = arith.constant 5.000000e-01 : f32
    %18 = vector.broadcast %cst_13 : f32 to vector<16x128xf32>
    %19 = arith.mulf %18, %17 : vector<16x128xf32>
    %20 = math.tanh %19 : vector<16x128xf32>
    %cst_14 = arith.constant 1.000000e+00 : f32
    %21 = vector.broadcast %cst_14 : f32 to vector<16x128xf32>
    %22 = arith.addf %20, %21 : vector<16x128xf32>
    %cst_15 = arith.constant 5.000000e-01 : f32
    %23 = vector.broadcast %cst_15 : f32 to vector<16x128xf32>
    %24 = arith.mulf %23, %22 : vector<16x128xf32>
    %c0_16 = arith.constant 0 : index
    %c0_17 = arith.constant 0 : index
    %25 = vector.load %arg6[%c0_16, %c0_17] : memref<16x128xf32, #tpu.memory_space<vmem>>, vector<16x128xf32>
    tpu.vector_store %arg6[%c0_16, %c0_17], %24 {strides = array<i32>} : memref<16x128xf32, #tpu.memory_space<vmem>>, vector<16x128xf32>,
    return
  }
  func.func @transform_0(%arg0: i32) -> (i32, i32) {
    %c0_i32 = arith.constant 0 : i32
    %c0_i32_0 = arith.constant 0 : i32
    return %arg0, %c0_i32 : i32, i32
  }
  func.func @transform_1(%arg0: i32) -> (i32, i32) {
    %c0_i32 = arith.constant 0 : i32
    %c0_i32_0 = arith.constant 0 : i32
    %c0_i32_1 = arith.constant 0 : i32
    return %c0_i32, %c0_i32_0 : i32, i32
  }
  func.func @transform_2(%arg0: i32) -> (i32, i32) {
    %c0_i32 = arith.constant 0 : i32
    %c0_i32_0 = arith.constant 0 : i32
    %c0_i32_1 = arith.constant 0 : i32
    return %c0_i32, %c0_i32_0 : i32, i32
  }
  func.func @transform_3(%arg0: i32) -> (i32, i32) {
    %c0_i32 = arith.constant 0 : i32
    %c0_i32_0 = arith.constant 0 : i32
    %c0_i32_1 = arith.constant 0 : i32
    return %c0_i32, %c0_i32_0 : i32, i32
  }
  func.func @transform_4(%arg0: i32) -> (i32, i32) {
    %c0_i32 = arith.constant 0 : i32
    %c0_i32_0 = arith.constant 0 : i32
    %c0_i32_1 = arith.constant 0 : i32
    return %c0_i32, %c0_i32_0 : i32, i32
  }
  func.func @transform_5(%arg0: i32) -> (i32, i32) {
    %c0_i32 = arith.constant 0 : i32
    %c0_i32_0 = arith.constant 0 : i32
    return %arg0, %c0_i32 : i32, i32
  }
}

</mosaic_0001>

<llo_original>
// kernel: backgammon_forward.1
$region0: #{backgammon_forward.1}
  #allocation0 [shape = 'u32[]', space=smem, size = 0x4, offset = 0x4, fixed_abs, tag = 'smem constant byte address 0x4 - core index']
  #allocation1 [shape = 'u32[144,128]{1,0:T(1,128)}', space=vmem, size = 0x12000, scoped, tag = 'internal scratch']
  %s0 = inlined_call_operand.vmem [shape: bf16[16,198], index: 0, kind: input, shape index: {}]
  %s1 = inlined_call_operand.vmem [shape: bf16[198,128], index: 1, kind: input, shape index: {}]
  %s2 = inlined_call_operand.vmem [shape: f32[1,128], index: 2, kind: input, shape index: {}]
  %s3 = inlined_call_operand.vmem [shape: f32[128,128], index: 3, kind: input, shape index: {}]
  %s4 = inlined_call_operand.vmem [shape: f32[1,128], index: 4, kind: input, shape index: {}]
  %s5 = inlined_call_operand.vmem [shape: f32[16,128], index: 5, kind: output, shape index: {}]
  %s6 = sld [smem:[#allocation0]]
  $region30: #{backgammon_forward.1} parent=0
    _
  %s8 = ssub.s32 1, %s6
  %s9 = scalar_select 0, %s8, %s6
  // Predicated region
  $region2: #{backgammon_forward.1} parent=0 // pred_check
    _
  $region3: #{backgammon_forward.1} parent=0 // pred_check_branch
    %11 = sbr.rel (0) target = $region5
  $region4: #{backgammon_forward.1} parent=0 // pred_region
    _
  $region5: #{backgammon_forward.1} parent=0 // pred_fallthru
    _
  // Predicated region
  $region6: #{backgammon_forward.1} parent=0 // pred_check
    _
  $region7: #{backgammon_forward.1} parent=0 // pred_check_branch
    %13 = sbr.rel (0) target = $region9
  $region8: #{backgammon_forward.1} parent=0 // pred_region
    _
  $region9: #{backgammon_forward.1} parent=0 // pred_fallthru
    _
  // Predicated region
  $region10: #{backgammon_forward.1} parent=0 // pred_check
    _
  $region11: #{backgammon_forward.1} parent=0 // pred_check_branch
    %15 = sbr.rel (0) target = $region13
  $region12: #{backgammon_forward.1} parent=0 // pred_region
    _
  $region13: #{backgammon_forward.1} parent=0 // pred_fallthru
    _
  // Predicated region
  $region14: #{backgammon_forward.1} parent=0 // pred_check
    _
  $region15: #{backgammon_forward.1} parent=0 // pred_check_branch
    %17 = sbr.rel (0) target = $region17
  $region16: #{backgammon_forward.1} parent=0 // pred_region
    _
  $region17: #{backgammon_forward.1} parent=0 // pred_fallthru
    _
  // Predicated region
  $region18: #{backgammon_forward.1} parent=0 // pred_check
    _
  $region19: #{backgammon_forward.1} parent=0 // pred_check_branch
    %19 = sbr.rel (0) target = $region21
  $region20: #{backgammon_forward.1} parent=0 // pred_region
    _
  $region21: #{backgammon_forward.1} parent=0 // pred_fallthru
    _
  %v21 = vld [vmem:[%s0] sm:$0xff]
  %v22 = vld [vmem:[%s0 + $0x8] sm:$0xff]
  %v23 = vld [vmem:[%s1] sm:$0xf]
  %v24 = vld [vmem:[%s1 + $0x4] sm:$0xf]
  %v25 = vld [vmem:[%s1 + $0x8] sm:$0xf]
  %v26 = vld [vmem:[%s1 + $0xc] sm:$0xf]
  %v27 = vld [vmem:[%s1 + $0x10] sm:$0xf]
  %v28 = vld [vmem:[%s1 + $0x14] sm:$0xf]
  %v29 = vld [vmem:[%s1 + $0x18] sm:$0xf]
  %v30 = vld [vmem:[%s1 + $0x1c] sm:$0xf]
  %v31 = vld [vmem:[%s1 + $0x20] sm:$0xf]
  %v32 = vld [vmem:[%s1 + $0x24] sm:$0xf]
  %v33 = vld [vmem:[%s1 + $0x28] sm:$0xf]
  %v34 = vld [vmem:[%s1 + $0x2c] sm:$0xf]
  %v35 = vld [vmem:[%s1 + $0x30] sm:$0xf]
  %v36 = vld [vmem:[%s1 + $0x34] sm:$0xf]
  %v37 = vld [vmem:[%s1 + $0x38] sm:$0xf]
  %v38 = vld [vmem:[%s1 + $0x3c] sm:$0xf]
  %v39 = vld [vmem:[%s1 + $0x40] sm:$0xf]
  %v40 = vld [vmem:[%s1 + $0x44] sm:$0xf]
  %v41 = vld [vmem:[%s1 + $0x48] sm:$0xf]
  %v42 = vld [vmem:[%s1 + $0x4c] sm:$0xf]
  %v43 = vld [vmem:[%s1 + $0x50] sm:$0xf]
  %v44 = vld [vmem:[%s1 + $0x54] sm:$0xf]
  %v45 = vld [vmem:[%s1 + $0x58] sm:$0xf]
  %v46 = vld [vmem:[%s1 + $0x5c] sm:$0xf]
  %v47 = vld [vmem:[%s1 + $0x60] sm:$0x7]
  %v48 = vld [vmem:[%s2] sm:$0x1]
  %v50 = vlaneseq
  %v51 = vshrl.u32 %v50, 7
  %v52 = vsub.s32 0, %v51
  %v53 = vrot.slane %v48, %v52
  %v57 = vunpack.c.l.b16 %v21
  %v58 = vunpack.c.h.b16 %v21
  %v59 = vunpack.c.l.b16 %v22
  %v60 = vunpack.c.h.b16 %v22
  %v61 = vpack.c.b16 %v59, %v57
  %v62 = vpack.c.b16 %v60, %v58
  %v89 = vunpack.c.l.b16 %v23
  %v90 = vunpack.c.l.b16 %v24
  %v91 = vunpack.c.l.b16 %v25
  %v92 = vunpack.c.l.b16 %v26
  %v93 = vunpack.c.l.b16 %v27
  %v94 = vunpack.c.l.b16 %v28
  %v95 = vunpack.c.l.b16 %v29
  %v96 = vunpack.c.l.b16 %v30
  %v97 = vunpack.c.l.b16 %v31
  %v98 = vunpack.c.l.b16 %v32
  %v99 = vunpack.c.l.b16 %v33
  %v100 = vunpack.c.l.b16 %v34
  %v101 = vunpack.c.l.b16 %v35
  %v102 = vunpack.c.l.b16 %v36
  %v103 = vunpack.c.l.b16 %v37
  %v104 = vunpack.c.l.b16 %v38
  %v105 = vunpack.c.l.b16 %v39
  %v106 = vunpack.c.l.b16 %v40
  %v107 = vunpack.c.l.b16 %v41
  %v108 = vunpack.c.l.b16 %v42
  %v109 = vunpack.c.l.b16 %v43
  %v110 = vunpack.c.l.b16 %v44
  %v111 = vunpack.c.l.b16 %v45
  %v112 = vunpack.c.l.b16 %v46
  %v113 = vunpack.c.l.b16 %v47
  %v114 = vpack.c.b16 %v90, %v89
  %v115 = vpack.c.b16 %v92, %v91
  %v116 = vpack.c.b16 %v94, %v93
  %v117 = vpack.c.b16 %v96, %v95
  %v118 = vpack.c.b16 %v98, %v97
  %v119 = vpack.c.b16 %v100, %v99
  %v120 = vpack.c.b16 %v102, %v101
  %v121 = vpack.c.b16 %v104, %v103
  %v122 = vpack.c.b16 %v106, %v105
  %v123 = vpack.c.b16 %v108, %v107
  %v124 = vpack.c.b16 %v110, %v109
  %v125 = vpack.c.b16 %v112, %v111
  %v126 = vpack.c.b16 %v113, %v113
  %vm139 = vcmask 572416
  %v141 = vsel %vm139, %v62, 0
  %vm143 = vcmask 1042432
  %v145 = vsel %vm143, %v126, 0
  %147 = vmatprep.subr.bf16.mxu0 0
  %148 = vmatpush1.bf16.msra.mxu0 %v121
  %149 = vmatprep.subr.bf16.mxu0 0
  %150 = vmatpush1.bf16.msra.mxu0 %v120
  %151 = vmatprep.subr.bf16.mxu0 0
  %152 = vmatpush1.bf16.msra.mxu0 %v119
  %153 = vmatprep.subr.bf16.mxu0 0
  %154 = vmatpush1.bf16.msra.mxu0 %v118
  %155 = vmatprep.subr.bf16.mxu0 0
  %156 = vmatpush1.bf16.msra.mxu0 %v117
  %157 = vmatprep.subr.bf16.mxu0 0
  %158 = vmatpush1.bf16.msra.mxu0 %v116
  %159 = vmatprep.subr.bf16.mxu0 0
  %160 = vmatpush1.bf16.msra.mxu0 %v115
  %161 = vmatprep.subr.bf16.mxu0 0
  %162 = vmatpush1.bf16.msra.mxu0 %v114
  %163 = vmatprep.subr.bf16.mxu0 0
  %164 = vmatpush2.bf16.msra.mxu0 0
  %165 = vmatprep.subr.bf16.mxu0 0
  %166 = vmatpush2.bf16.msra.mxu0 0
  %167 = vmatprep.subr.bf16.mxu0 0
  %168 = vmatpush2.bf16.msra.mxu0 0
  %169 = vmatprep.subr.bf16.mxu0 0
  %170 = vmatpush2.bf16.msra.mxu0 %v145
  %171 = vmatprep.subr.bf16.mxu0 0
  %172 = vmatpush2.bf16.msra.mxu0 %v125
  %173 = vmatprep.subr.bf16.mxu0 0
  %174 = vmatpush2.bf16.msra.mxu0 %v124
  %175 = vmatprep.subr.bf16.mxu0 0
  %176 = vmatpush2.bf16.msra.mxu0 %v123
  %177 = vmatprep.subr.bf16.mxu0 0
  %178 = vmatpush2.bf16.msra.mxu0 %v122
  %179 = vmatprep.mubr.bf16.mxu0 %v141
  %180 = vmatmul.mubr.bf16.gmra.mxu0 %v61
  %v181 = vpop.f32.mrf.mxu0
  %v182 = vadd.f32 %v53, %v181
  %v183 = vpop.f32.mrf.mxu0
  %v184 = vpop.f32.mrf.mxu0
  %v185 = vadd.f32 %v53, %v184
  %v186 = vpop.f32.mrf.mxu0
  %187 = vdwg.mxu0
  %v188 = vmul.f32 %v182, 0.5
  %v189 = vmul.f32 %v185, 0.5
  %v190 = vtanh.pop %v188
  %v191 = vtanh.pop %v189
  %v192 = vadd.f32 %v190, 1.0
  %v193 = vadd.f32 %v191, 1.0
  %v194 = vmul.f32 %v192, 0.5
  %v195 = vmul.f32 %v193, 0.5
  %v196 = vld [vmem:[%s3] sm:$0xff]
  %v197 = vld [vmem:[%s3 + $0x8] sm:$0xff]
  %v198 = vld [vmem:[%s3 + $0x10] sm:$0xff]
  %v199 = vld [vmem:[%s3 + $0x18] sm:$0xff]
  %v200 = vld [vmem:[%s3 + $0x20] sm:$0xff]
  %v201 = vld [vmem:[%s3 + $0x28] sm:$0xff]
  %v202 = vld [vmem:[%s3 + $0x30] sm:$0xff]
  %v203 = vld [vmem:[%s3 + $0x38] sm:$0xff]
  %v204 = vld [vmem:[%s3 + $0x40] sm:$0xff]
  %v205 = vld [vmem:[%s3 + $0x48] sm:$0xff]
  %v206 = vld [vmem:[%s3 + $0x50] sm:$0xff]
  %v207 = vld [vmem:[%s3 + $0x58] sm:$0xff]
  %v208 = vld [vmem:[%s3 + $0x60] sm:$0xff]
  %v209 = vld [vmem:[%s3 + $0x68] sm:$0xff]
  %v210 = vld [vmem:[%s3 + $0x70] sm:$0xff]
  %v211 = vld [vmem:[%s3 + $0x78] sm:$0xff]
  %v212 = vld [vmem:[%s4] sm:$0x1]
  %v214 = vlaneseq
  %v215 = vshrl.u32 %v214, 7
  %v216 = vsub.s32 0, %v215
  %v217 = vrot.slane %v212, %v216
  %219 = vmatprep.subr.mxu0 0.0
  %220 = vmatpush1.msra.mxu0 %v211
  %221 = vmatprep.subr.mxu0 0.0
  %222 = vmatpush1.msra.mxu0 %v210
  %223 = vmatprep.subr.mxu0 0.0
  %224 = vmatpush1.msra.mxu0 %v209
  %225 = vmatprep.subr.mxu0 0.0
  %226 = vmatpush1.msra.mxu0 %v208
  %227 = vmatprep.subr.mxu0 0.0
  %228 = vmatpush1.msra.mxu0 %v207
  %229 = vmatprep.subr.mxu0 0.0
  %230 = vmatpush1.msra.mxu0 %v206
  %231 = vmatprep.subr.mxu0 0.0
  %232 = vmatpush1.msra.mxu0 %v205
  %233 = vmatprep.subr.mxu0 0.0
  %234 = vmatpush1.msra.mxu0 %v204
  %235 = vmatprep.subr.mxu0 0.0
  %236 = vmatpush1.msra.mxu0 %v203
  %237 = vmatprep.subr.mxu0 0.0
  %238 = vmatpush1.msra.mxu0 %v202
  %239 = vmatprep.subr.mxu0 0.0
  %240 = vmatpush1.msra.mxu0 %v201
  %241 = vmatprep.subr.mxu0 0.0
  %242 = vmatpush1.msra.mxu0 %v200
  %243 = vmatprep.subr.mxu0 0.0
  %244 = vmatpush1.msra.mxu0 %v199
  %245 = vmatprep.subr.mxu0 0.0
  %246 = vmatpush1.msra.mxu0 %v198
  %247 = vmatprep.subr.mxu0 0.0
  %248 = vmatpush1.msra.mxu0 %v197
  %249 = vmatprep.subr.mxu0 0.0
  %250 = vmatpush1.msra.mxu0 %v196
  %251 = vmatprep.subr.mxu0 0.0
  %252 = vmatpush2.msra.mxu0 0.0
  %253 = vmatprep.subr.mxu0 0.0
  %254 = vmatpush2.msra.mxu0 0.0
  %255 = vmatprep.subr.mxu0 0.0
  %256 = vmatpush2.msra.mxu0 0.0
  %257 = vmatprep.subr.mxu0 0.0
  %258 = vmatpush2.msra.mxu0 0.0
  %259 = vmatprep.subr.mxu0 0.0
  %260 = vmatpush2.msra.mxu0 0.0
  %261 = vmatprep.subr.mxu0 0.0
  %262 = vmatpush2.msra.mxu0 0.0
  %263 = vmatprep.subr.mxu0 0.0
  %264 = vmatpush2.msra.mxu0 0.0
  %265 = vmatprep.subr.mxu0 0.0
  %266 = vmatpush2.msra.mxu0 0.0
  %267 = vmatprep.subr.mxu0 0.0
  %268 = vmatpush2.msra.mxu0 0.0
  %269 = vmatprep.subr.mxu0 0.0
  %270 = vmatpush2.msra.mxu0 0.0
  %271 = vmatprep.subr.mxu0 0.0
  %272 = vmatpush2.msra.mxu0 0.0
  %273 = vmatprep.subr.mxu0 0.0
  %274 = vmatpush2.msra.mxu0 0.0
  %275 = vmatprep.subr.mxu0 0.0
  %276 = vmatpush2.msra.mxu0 0.0
  %277 = vmatprep.subr.mxu0 0.0
  %278 = vmatpush2.msra.mxu0 0.0
  %279 = vmatprep.subr.mxu0 0.0
  %280 = vmatpush2.msra.mxu0 0.0
  %281 = vmatprep.subr.mxu0 0.0
  %282 = vmatpush2.msra.mxu0 0.0
  %283 = vmatprep.mubr.f32.mxu0 0.0
  %284 = vmatmul.mubr.f32.gmra.mxu0 %v194
  %v285 = vpop.f32.mrf.mxu0
  %v286 = vadd.f32 %v217, %v285
  %v287 = vpop.f32.mrf.mxu0
  %288 = vmatprep.mubr.f32.mxu0 0.0
  %289 = vmatmul.mubr.f32.gmra.mxu0 %v195
  %v290 = vpop.f32.mrf.mxu0
  %v291 = vadd.f32 %v217, %v290
  %v292 = vpop.f32.mrf.mxu0
  %293 = vdwg.mxu0
  %v294 = vmul.f32 %v286, 0.5
  %v295 = vmul.f32 %v291, 0.5
  %v296 = vtanh.pop %v294
  %v297 = vtanh.pop %v295
  %v298 = vadd.f32 %v296, 1.0
  %v299 = vadd.f32 %v297, 1.0
  %v300 = vmul.f32 %v298, 0.5
  %v301 = vmul.f32 %v299, 0.5
  %302 = vst [vmem:[%s5] sm:$0xff] %v300
  %303 = vst [vmem:[%s5 + $0x8] sm:$0xff] %v301
  // Predicated region
  $region22: #{backgammon_forward.1} parent=0 // pred_check
    _
  $region23: #{backgammon_forward.1} parent=0 // pred_check_branch
    %305 = sbr.rel (0) target = $region25
  $region24: #{backgammon_forward.1} parent=0 // pred_region
    _
  $region25: #{backgammon_forward.1} parent=0 // pred_fallthru
    _
  // Predicated region
  $region26: #{backgammon_forward.1} parent=0 // pred_check
    _
  $region27: #{backgammon_forward.1} parent=0 // pred_check_branch
    %307 = sbr.rel (0) target = $region29
  $region28: #{backgammon_forward.1} parent=0 // pred_region
    _
  $region29: #{backgammon_forward.1} parent=0 // pred_fallthru
    _

</llo_original>
